<compile_context>
chip_gen: v7x
topology: tpu7x:2x2x1
jax: 0.10.0
libtpu: 0.0.40
codegen_flags: <defaults>
</compile_context>

<pallas_src>
import functools

import jax
import jax.numpy as jnp
from jax.experimental import pallas as pl
from jax.experimental.pallas import tpu as pltpu

LANE = 128
SUBLANE = 8


def _round_up(n, m):
    return (n + m - 1) // m * m


# ----------------------------- Pallas kernel -------------------------------


def _fused_encoder_kernel(*refs, num_hidden, has_label):
    """Fused MLP + two-head encoder.

    refs layout: x, [label_contrib], (w_i, b_i) * num_hidden, w_head, b_head, out
    All activations stay on-chip; only the fused head output is written back.
    """
    idx = 0
    h = refs[idx][...]
    idx += 1
    lab = None
    if has_label:
        lab = refs[idx][...]
        idx += 1
    o_ref = refs[-1]

    for li in range(num_hidden):
        w = refs[idx][...]
        b = refs[idx + 1][...]
        idx += 2
        acc = jnp.dot(h, w, preferred_element_type=jnp.float32) + b
        if li == 0 and lab is not None:
            # one_hot(c) @ W_label, pre-gathered in the wrapper
            acc = acc + lab
        h = jnp.maximum(acc, 0.0)

    w_head = refs[idx][...]
    b_head = refs[idx + 1][...]
    out = jnp.dot(h, w_head, preferred_element_type=jnp.float32) + b_head
    o_ref[...] = out.astype(o_ref.dtype)


# ------------------------- parameter preparation ---------------------------


def init_encoder_params(key, layer_sizes, latent_size, conditional, num_labels):
    """Deterministic synthetic init matching the PyTorch module's shapes.
    Weights stored as [D_in, D_out] (transposed vs nn.Linear) — same math."""
    sizes = list(layer_sizes)
    if conditional:
        sizes[0] += num_labels
    params = {"mlp": []}
    for in_size, out_size in zip(sizes[:-1], sizes[1:]):
        key, kw, kb = jax.random.split(key, 3)
        bound = 1.0 / jnp.sqrt(in_size)
        w = jax.random.uniform(kw, (in_size, out_size), jnp.float32, -bound, bound)
        b = jax.random.uniform(kb, (1, out_size), jnp.float32, -bound, bound)
        params["mlp"].append((w, b))
    last = sizes[-1]
    bound = 1.0 / jnp.sqrt(last)
    key, k1, k2, k3, k4 = jax.random.split(key, 5)
    params["w_means"] = jax.random.uniform(k1, (last, latent_size), jnp.float32, -bound, bound)
    params["b_means"] = jax.random.uniform(k2, (1, latent_size), jnp.float32, -bound, bound)
    params["w_logvar"] = jax.random.uniform(k3, (last, latent_size), jnp.float32, -bound, bound)
    params["b_logvar"] = jax.random.uniform(k4, (1, latent_size), jnp.float32, -bound, bound)
    return params


def prepare_padded_params(params, layer_sizes, latent_size, conditional, num_labels):
    """One-time layout pass: pad all weights to lane-friendly (x128) shapes,
    split the label rows out of the first weight, and fuse the two heads."""
    d_x = layer_sizes[0]  # un-augmented input width
    pp = {"w": [], "b": []}
    for li, (w, b) in enumerate(params["mlp"]):
        if li == 0 and conditional:
            w_x, w_lab = w[:d_x], w[d_x:]
        else:
            w_x, w_lab = w, None
        din, dout = w_x.shape
        din_p, dout_p = _round_up(din, LANE), _round_up(dout, LANE)
        wp = jnp.zeros((din_p, dout_p), jnp.float32).at[:din, :dout].set(w_x)
        bp = jnp.zeros((1, dout_p), jnp.float32).at[:, :dout].set(b)
        pp["w"].append(wp)
        pp["b"].append(bp)
        if w_lab is not None:
            pp["w_label"] = (
                jnp.zeros((num_labels, dout_p), jnp.float32).at[:, :dout].set(w_lab)
            )
    # fused means|log_var head
    h_last = layer_sizes[-1]
    wh = jnp.concatenate([params["w_means"], params["w_logvar"]], axis=1)  # [h_last, 2L]
    bh = jnp.concatenate([params["b_means"], params["b_logvar"]], axis=1)  # [1, 2L]
    hin_p = _round_up(h_last, LANE)
    hout_p = _round_up(2 * latent_size, LANE)
    pp["w_head"] = jnp.zeros((hin_p, hout_p), jnp.float32).at[:h_last, : 2 * latent_size].set(wh)
    pp["b_head"] = jnp.zeros((1, hout_p), jnp.float32).at[:, : 2 * latent_size].set(bh)
    return pp


# ----------------------------- Encoder wrapper ------------------------------


def encoder_forward(pp, x, c=None, *, latent_size, conditional=False):
    B, d_x = x.shape
    d_xp = pp["w"][0].shape[0]
    num_hidden = len(pp["w"])
    hout_p = pp["w_head"].shape[1]

    # batch tiling: one parallel grid axis (shards across TCs on v7x)
    tile_b = 128 if B > 128 else _round_up(B, SUBLANE)
    Bp = _round_up(B, tile_b)

    x_pad = jnp.pad(x.astype(jnp.float32), ((0, Bp - B), (0, d_xp - d_x)))
    inputs = [x_pad]
    in_specs = [pl.BlockSpec((tile_b, d_xp), lambda i: (i, 0))]

    if conditional:
        # one_hot(c) @ W_label  ==  row gather of the label rows of W1
        lab = pp["w_label"][c.reshape(-1)]
        lab = jnp.pad(lab, ((0, Bp - B), (0, 0)))
        inputs.append(lab)
        in_specs.append(pl.BlockSpec((tile_b, lab.shape[1]), lambda i: (i, 0)))

    flat_params = []
    for w, b in zip(pp["w"], pp["b"]):
        flat_params += [w, b]
    flat_params += [pp["w_head"], pp["b_head"]]
    inputs += flat_params
    # constant index_map: weights stay VMEM-resident across batch tiles
    in_specs += [pl.BlockSpec(p.shape, lambda i: (0, 0)) for p in flat_params]

    out = pl.pallas_call(
        functools.partial(
            _fused_encoder_kernel, num_hidden=num_hidden, has_label=conditional
        ),
        out_shape=jax.ShapeDtypeStruct((Bp, hout_p), jnp.float32),
        grid_spec=pltpu.PrefetchScalarGridSpec(
            num_scalar_prefetch=0,
            grid=(Bp // tile_b,),
            in_specs=in_specs,
            out_specs=pl.BlockSpec((tile_b, hout_p), lambda i: (i, 0)),
        ),
        compiler_params=pltpu.CompilerParams(
            dimension_semantics=("parallel",),
            vmem_limit_bytes=32 * 1024 * 1024,
        ),
    )(*inputs)

    means = out[:B, :latent_size]
    log_vars = out[:B, latent_size : 2 * latent_size]
    return means, log_vars


# ------------------------------- reference ----------------------------------


def idx2onehot(idx, n):
    idx = idx.reshape(-1)
    return jax.nn.one_hot(idx, n, dtype=jnp.float32)


def encoder_forward_ref(params, x, c=None, *, conditional=False, num_labels=0):
    if conditional:
        x = jnp.concatenate([x, idx2onehot(c, num_labels)], axis=-1)
    for w, b in params["mlp"]:
        x = jnp.maximum(x @ w + b, 0.0)
    return (
        x @ params["w_means"] + params["b_means"],
        x @ params["w_logvar"] + params["b_logvar"],
    )


# --------------------------------- main --------------------------------------


if __name__ == "__main__":
    # Small config consistent with the module: MLP [32 -> 64 -> 32], latent 8,
    # conditional with 4 labels, batch 8.
    layer_sizes = [32, 64, 32]
    latent_size = 8
    conditional = True
    num_labels = 4
    batch = 8

    key = jax.random.PRNGKey(0)
    key, kp, kx, kc = jax.random.split(key, 4)

    params = init_encoder_params(kp, layer_sizes, latent_size, conditional, num_labels)
    pp = prepare_padded_params(params, layer_sizes, latent_size, conditional, num_labels)

    x = jax.random.normal(kx, (batch, layer_sizes[0]), jnp.float32)
    c = jax.random.randint(kc, (batch,), 0, num_labels)

    fwd = jax.jit(
        functools.partial(
            encoder_forward, latent_size=latent_size, conditional=conditional
        )
    )
    means, log_vars = fwd(pp, x, c)
    jax.block_until_ready((means, log_vars))

    means_ref, log_vars_ref = encoder_forward_ref(
        params, x, c, conditional=conditional, num_labels=num_labels
    )
    assert means.shape == (batch, latent_size)
    assert log_vars.shape == (batch, latent_size)
    assert jnp.allclose(means, means_ref, atol=1e-5, rtol=1e-5)
    assert jnp.allclose(log_vars, log_vars_ref, atol=1e-5, rtol=1e-5)

    print("KERNEL_OK")
</pallas_src>

<mosaic_0001>
module attributes {stable_mosaic.version = 11 : i64} {
  func.func @_fused_encoder_kernel(%arg0: i32, %arg1: memref<8x128xf32, #tpu.memory_space<vmem>>, %arg2: memref<8x128xf32, #tpu.memory_space<vmem>>, %arg3: memref<128x128xf32, #tpu.memory_space<vmem>>, %arg4: memref<1x128xf32, #tpu.memory_space<vmem>>, %arg5: memref<128x128xf32, #tpu.memory_space<vmem>>, %arg6: memref<1x128xf32, #tpu.memory_space<vmem>>, %arg7: memref<128x128xf32, #tpu.memory_space<vmem>>, %arg8: memref<1x128xf32, #tpu.memory_space<vmem>>, %arg9: memref<8x128xf32, #tpu.memory_space<vmem>>) attributes {dimension_semantics = [#tpu.dimension_semantics<parallel>], iteration_bounds = array<i64: 1>, scalar_prefetch = 0 : i64, scratch_operands = 0 : i64, tpu.core_type = #tpu.core_type<tc>, window_params = [{transform_indices = @transform_0, window_bounds = array<i64: 8, 128>}, {transform_indices = @transform_1, window_bounds = array<i64: 8, 128>}, {pipeline_mode = #tpu.pipeline_mode<synchronous>, transform_indices = @transform_2, window_bounds = array<i64: 128, 128>}, {pipeline_mode = #tpu.pipeline_mode<synchronous>, transform_indices = @transform_3, window_bounds = array<i64: 1, 128>}, {pipeline_mode = #tpu.pipeline_mode<synchronous>, transform_indices = @transform_4, window_bounds = array<i64: 128, 128>}, {pipeline_mode = #tpu.pipeline_mode<synchronous>, transform_indices = @transform_5, window_bounds = array<i64: 1, 128>}, {pipeline_mode = #tpu.pipeline_mode<synchronous>, transform_indices = @transform_6, window_bounds = array<i64: 128, 128>}, {pipeline_mode = #tpu.pipeline_mode<synchronous>, transform_indices = @transform_7, window_bounds = array<i64: 1, 128>}, {transform_indices = @transform_8, window_bounds = array<i64: 8, 128>}]} {
    %c0 = arith.constant 0 : index
    %c0_0 = arith.constant 0 : index
    %0 = vector.load %arg1[%c0, %c0_0] : memref<8x128xf32, #tpu.memory_space<vmem>>, vector<8x128xf32>
    %c0_1 = arith.constant 0 : index
    %c0_2 = arith.constant 0 : index
    %1 = vector.load %arg2[%c0_1, %c0_2] : memref<8x128xf32, #tpu.memory_space<vmem>>, vector<8x128xf32>
    %c0_3 = arith.constant 0 : index
    %c0_4 = arith.constant 0 : index
    %2 = vector.load %arg3[%c0_3, %c0_4] : memref<128x128xf32, #tpu.memory_space<vmem>>, vector<128x128xf32>
    %c0_5 = arith.constant 0 : index
    %c0_6 = arith.constant 0 : index
    %3 = vector.load %arg4[%c0_5, %c0_6] : memref<1x128xf32, #tpu.memory_space<vmem>>, vector<1x128xf32>
    %cst = arith.constant dense<0.000000e+00> : vector<8x128xf32>
    %4 = tpu.matmul %0, %2, %cst {dimension_numbers = #tpu.dot_dimension_numbers<[1], [0], [0], [1], [0, 0, 1, 1], [], []>} : vector<8x128xf32>, vector<128x128xf32>, vector<8x128xf32> -> vector<8x128xf32>
    %5 = vector.broadcast %3 : vector<1x128xf32> to vector<8x128xf32>
    %6 = arith.addf %4, %5 : vector<8x128xf32>
    %7 = arith.addf %6, %1 : vector<8x128xf32>
    %cst_7 = arith.constant 0.000000e+00 : f32
    %8 = vector.broadcast %cst_7 : f32 to vector<8x128xf32>
    %9 = arith.maximumf %7, %8 : vector<8x128xf32>
    %c0_8 = arith.constant 0 : index
    %c0_9 = arith.constant 0 : index
    %10 = vector.load %arg5[%c0_8, %c0_9] : memref<128x128xf32, #tpu.memory_space<vmem>>, vector<128x128xf32>
    %c0_10 = arith.constant 0 : index
    %c0_11 = arith.constant 0 : index
    %11 = vector.load %arg6[%c0_10, %c0_11] : memref<1x128xf32, #tpu.memory_space<vmem>>, vector<1x128xf32>
    %cst_12 = arith.constant dense<0.000000e+00> : vector<8x128xf32>
    %12 = tpu.matmul %9, %10, %cst_12 {dimension_numbers = #tpu.dot_dimension_numbers<[1], [0], [0], [1], [0, 0, 1, 1], [], []>} : vector<8x128xf32>, vector<128x128xf32>, vector<8x128xf32> -> vector<8x128xf32>
    %13 = vector.broadcast %11 : vector<1x128xf32> to vector<8x128xf32>
    %14 = arith.addf %12, %13 : vector<8x128xf32>
    %cst_13 = arith.constant 0.000000e+00 : f32
    %15 = vector.broadcast %cst_13 : f32 to vector<8x128xf32>
    %16 = arith.maximumf %14, %15 : vector<8x128xf32>
    %c0_14 = arith.constant 0 : index
    %c0_15 = arith.constant 0 : index
    %17 = vector.load %arg7[%c0_14, %c0_15] : memref<128x128xf32, #tpu.memory_space<vmem>>, vector<128x128xf32>
    %c0_16 = arith.constant 0 : index
    %c0_17 = arith.constant 0 : index
    %18 = vector.load %arg8[%c0_16, %c0_17] : memref<1x128xf32, #tpu.memory_space<vmem>>, vector<1x128xf32>
    %cst_18 = arith.constant dense<0.000000e+00> : vector<8x128xf32>
    %19 = tpu.matmul %16, %17, %cst_18 {dimension_numbers = #tpu.dot_dimension_numbers<[1], [0], [0], [1], [0, 0, 1, 1], [], []>} : vector<8x128xf32>, vector<128x128xf32>, vector<8x128xf32> -> vector<8x128xf32>
    %20 = vector.broadcast %18 : vector<1x128xf32> to vector<8x128xf32>
    %21 = arith.addf %19, %20 : vector<8x128xf32>
    %c0_19 = arith.constant 0 : index
    %c0_20 = arith.constant 0 : index
    %22 = vector.load %arg9[%c0_19, %c0_20] : memref<8x128xf32, #tpu.memory_space<vmem>>, vector<8x128xf32>
    tpu.vector_store %arg9[%c0_19, %c0_20], %21 {strides = array<i32>} : memref<8x128xf32, #tpu.memory_space<vmem>>, vector<8x128xf32>,
    return
  }
  func.func @transform_0(%arg0: i32) -> (i32, i32) {
    %c0_i32 = arith.constant 0 : i32
    %c0_i32_0 = arith.constant 0 : i32
    return %arg0, %c0_i32 : i32, i32
  }
  func.func @transform_1(%arg0: i32) -> (i32, i32) {
    %c0_i32 = arith.constant 0 : i32
    %c0_i32_0 = arith.constant 0 : i32
    return %arg0, %c0_i32 : i32, i32
  }
  func.func @transform_2(%arg0: i32) -> (i32, i32) {
    %c0_i32 = arith.constant 0 : i32
    %c0_i32_0 = arith.constant 0 : i32
    %c0_i32_1 = arith.constant 0 : i32
    return %c0_i32, %c0_i32_0 : i32, i32
  }
  func.func @transform_3(%arg0: i32) -> (i32, i32) {
    %c0_i32 = arith.constant 0 : i32
    %c0_i32_0 = arith.constant 0 : i32
    %c0_i32_1 = arith.constant 0 : i32
    return %c0_i32, %c0_i32_0 : i32, i32
  }
  func.func @transform_4(%arg0: i32) -> (i32, i32) {
    %c0_i32 = arith.constant 0 : i32
    %c0_i32_0 = arith.constant 0 : i32
    %c0_i32_1 = arith.constant 0 : i32
    return %c0_i32, %c0_i32_0 : i32, i32
  }
  func.func @transform_5(%arg0: i32) -> (i32, i32) {
    %c0_i32 = arith.constant 0 : i32
    %c0_i32_0 = arith.constant 0 : i32
    %c0_i32_1 = arith.constant 0 : i32
    return %c0_i32, %c0_i32_0 : i32, i32
  }
  func.func @transform_6(%arg0: i32) -> (i32, i32) {
    %c0_i32 = arith.constant 0 : i32
    %c0_i32_0 = arith.constant 0 : i32
    %c0_i32_1 = arith.constant 0 : i32
    return %c0_i32, %c0_i32_0 : i32, i32
  }
  func.func @transform_7(%arg0: i32) -> (i32, i32) {
    %c0_i32 = arith.constant 0 : i32
    %c0_i32_0 = arith.constant 0 : i32
    %c0_i32_1 = arith.constant 0 : i32
    return %c0_i32, %c0_i32_0 : i32, i32
  }
  func.func @transform_8(%arg0: i32) -> (i32, i32) {
    %c0_i32 = arith.constant 0 : i32
    %c0_i32_0 = arith.constant 0 : i32
    return %arg0, %c0_i32 : i32, i32
  }
}

</mosaic_0001>

<llo_original>
// kernel: encoder_forward.1
$region0: #{encoder_forward.1}
  #allocation0 [shape = 'u32[]', space=smem, size = 0x4, offset = 0x4, fixed_abs, tag = 'smem constant byte address 0x4 - core index']
  #allocation1 [shape = 'u32[144,128]{1,0:T(1,128)}', space=vmem, size = 0x12000, scoped, tag = 'internal scratch']
  %s0 = inlined_call_operand.vmem [shape: f32[8,128], index: 0, kind: input, shape index: {}]
  %s1 = inlined_call_operand.vmem [shape: f32[8,128], index: 1, kind: input, shape index: {}]
  %s2 = inlined_call_operand.hbm [shape: f32[128,128], index: 2, kind: input, shape index: {}]
  %s3 = inlined_call_operand.vmem [shape: f32[1,128], index: 3, kind: input, shape index: {}]
  %s4 = inlined_call_operand.hbm [shape: f32[128,128], index: 4, kind: input, shape index: {}]
  %s5 = inlined_call_operand.vmem [shape: f32[1,128], index: 5, kind: input, shape index: {}]
  %s6 = inlined_call_operand.hbm [shape: f32[128,128], index: 6, kind: input, shape index: {}]
  %s7 = inlined_call_operand.vmem [shape: f32[1,128], index: 7, kind: input, shape index: {}]
  %s8 = inlined_call_operand.vmem [shape: f32[8,128], index: 8, kind: output, shape index: {}]
  %s9 = sld [smem:[#allocation0]]
  $region54: #{encoder_forward.1} parent=0
    _
  %s11 = ssub.s32 1, %s9
  %s12 = scalar_select 0, %s11, %s9
  $region1: #{encoder_forward.1} parent=0
    #allocation2 [shape = 'u8[65536]{0}', space=vmem, size = 0x10000, scoped, tag = 'input window, operand 2, single buffered']
    #allocation3 [shape = 's32[1]{0}', space=sflag, size = 0x4, scoped, tag = 'scoped memory for encoder_forward.1']
    #allocation4 [shape = 'u8[65536]{0}', space=vmem, size = 0x10000, scoped, tag = 'input window, operand 4, single buffered']
    #allocation5 [shape = 's32[1]{0}', space=sflag, size = 0x4, scoped, tag = 'scoped memory for encoder_forward.1']
    #allocation6 [shape = 'u8[65536]{0}', space=vmem, size = 0x10000, scoped, tag = 'input window, operand 6, single buffered']
    %13 = vsyncpa [#allocation3], 0
    %14 = vsyncpa [#allocation5], 0
    // Predicated region
    $region2: #{encoder_forward.1} parent=1 // pred_check
      _
    $region3: #{encoder_forward.1} parent=1 // pred_check_branch
      %16 = sbr.rel (0) target = $region5
    $region4: #{encoder_forward.1} parent=1 // pred_region
      _
    $region5: #{encoder_forward.1} parent=1 // pred_fallthru
      _
    // Predicated region
    $region6: #{encoder_forward.1} parent=1 // pred_check
      _
    $region7: #{encoder_forward.1} parent=1 // pred_check_branch
      %18 = sbr.rel (0) target = $region9
    $region8: #{encoder_forward.1} parent=1 // pred_region
      _
    $region9: #{encoder_forward.1} parent=1 // pred_fallthru
      _
    // Predicated region
    $region10: #{encoder_forward.1} parent=1 // pred_check
      _
    $region11: #{encoder_forward.1} parent=1 // pred_check_branch
      %20 = sbr.rel (0) target = $region13
    $region12: #{encoder_forward.1} parent=1 // pred_region
      %s22 = ssub.s32 2048, 2048
      %23 = vsyncadd [#allocation3], %s22
      %s24 = sshll.u32 [#allocation2], 4
      %s25 = int_to_ptr.vmem [resolvable:$true] %s24
      %30 = dma.hbm_to_vmem [thread:$0]  %s2, 2048, %s25, [#allocation3], 128, 128, 8
    $region13: #{encoder_forward.1} parent=1 // pred_fallthru
      _
    // Predicated region
    $region14: #{encoder_forward.1} parent=1 // pred_check
      _
    $region15: #{encoder_forward.1} parent=1 // pred_check_branch
      %32 = sbr.rel (0) target = $region17
    $region16: #{encoder_forward.1} parent=1 // pred_region
      _
    $region17: #{encoder_forward.1} parent=1 // pred_fallthru
      _
    // Predicated region
    $region18: #{encoder_forward.1} parent=1 // pred_check
      _
    $region19: #{encoder_forward.1} parent=1 // pred_check_branch
      %34 = sbr.rel (0) target = $region21
    $region20: #{encoder_forward.1} parent=1 // pred_region
      %s36 = ssub.s32 2048, 2048
      %37 = vsyncadd [#allocation5], %s36
      %s38 = sshll.u32 [#allocation4], 4
      %s39 = int_to_ptr.vmem [resolvable:$true] %s38
      %44 = dma.hbm_to_vmem [thread:$0]  %s4, 2048, %s39, [#allocation5], 128, 128, 8
    $region21: #{encoder_forward.1} parent=1 // pred_fallthru
      _
    // Predicated region
    $region22: #{encoder_forward.1} parent=1 // pred_check
      _
    $region23: #{encoder_forward.1} parent=1 // pred_check_branch
      %46 = sbr.rel (0) target = $region25
    $region24: #{encoder_forward.1} parent=1 // pred_region
      _
    $region25: #{encoder_forward.1} parent=1 // pred_fallthru
      _
    // Predicated region
    $region26: #{encoder_forward.1} parent=1 // pred_check
      _
    $region27: #{encoder_forward.1} parent=1 // pred_check_branch
      %48 = sbr.rel (0) target = $region29
    $region28: #{encoder_forward.1} parent=1 // pred_region
      %s50 = ssub.s32 2048, 2048
      %51 = vsyncadd [#allocation5], %s50
      %s52 = sshll.u32 [#allocation6], 4
      %s53 = int_to_ptr.vmem [resolvable:$true] %s52
      %58 = dma.hbm_to_vmem [thread:$0]  %s6, 2048, %s53, [#allocation5], 128, 128, 8
    $region29: #{encoder_forward.1} parent=1 // pred_fallthru
      _
    // Predicated region
    $region30: #{encoder_forward.1} parent=1 // pred_check
      _
    $region31: #{encoder_forward.1} parent=1 // pred_check_branch
      %60 = sbr.rel (0) target = $region33
    $region32: #{encoder_forward.1} parent=1 // pred_region
      _
    $region33: #{encoder_forward.1} parent=1 // pred_fallthru
      _
    // Predicated region
    $region34: #{encoder_forward.1} parent=1 // pred_check
      _
    $region35: #{encoder_forward.1} parent=1 // pred_check_branch
      %62 = sbr.rel (0) target = $region37
    $region36: #{encoder_forward.1} parent=1 // pred_region
      %63 = dma.done [#allocation3], 2048
    $region37: #{encoder_forward.1} parent=1 // pred_fallthru
      _
    // Predicated region
    $region38: #{encoder_forward.1} parent=1 // pred_check
      _
    $region39: #{encoder_forward.1} parent=1 // pred_check_branch
      %65 = sbr.rel (0) target = $region41
    $region40: #{encoder_forward.1} parent=1 // pred_region
      %66 = dma.done [#allocation5], 2048
    $region41: #{encoder_forward.1} parent=1 // pred_fallthru
      _
    // Predicated region
    $region42: #{encoder_forward.1} parent=1 // pred_check
      _
    $region43: #{encoder_forward.1} parent=1 // pred_check_branch
      %68 = sbr.rel (0) target = $region45
    $region44: #{encoder_forward.1} parent=1 // pred_region
      %69 = dma.done [#allocation5], 2048
    $region45: #{encoder_forward.1} parent=1 // pred_fallthru
      _
    %v70 = vld [vmem:[%s0] sm:$0xff]
    %v71 = vld [vmem:[%s1] sm:$0xff]
    %v72 = vld [vmem:[#allocation2] sm:$0xff]
    %v73 = vld [vmem:[#allocation2 + $0x8] sm:$0xff]
    %v74 = vld [vmem:[#allocation2 + $0x10] sm:$0xff]
    %v75 = vld [vmem:[#allocation2 + $0x18] sm:$0xff]
    %v76 = vld [vmem:[#allocation2 + $0x20] sm:$0xff]
    %v77 = vld [vmem:[#allocation2 + $0x28] sm:$0xff]
    %v78 = vld [vmem:[#allocation2 + $0x30] sm:$0xff]
    %v79 = vld [vmem:[#allocation2 + $0x38] sm:$0xff]
    %v80 = vld [vmem:[#allocation2 + $0x40] sm:$0xff]
    %v81 = vld [vmem:[#allocation2 + $0x48] sm:$0xff]
    %v82 = vld [vmem:[#allocation2 + $0x50] sm:$0xff]
    %v83 = vld [vmem:[#allocation2 + $0x58] sm:$0xff]
    %v84 = vld [vmem:[#allocation2 + $0x60] sm:$0xff]
    %v85 = vld [vmem:[#allocation2 + $0x68] sm:$0xff]
    %v86 = vld [vmem:[#allocation2 + $0x70] sm:$0xff]
    %v87 = vld [vmem:[#allocation2 + $0x78] sm:$0xff]
    %v88 = vld [vmem:[%s3] sm:$0x1]
    %v90 = vlaneseq
    %v91 = vshrl.u32 %v90, 7
    %v92 = vsub.s32 0, %v91
    %v93 = vrot.slane %v88, %v92
    %95 = vmatprep.subr.mxu0 0.0
    %96 = vmatpush1.msra.mxu0 %v72
    %97 = vmatprep.subr.mxu0 0.0
    %98 = vmatpush1.msra.mxu0 %v73
    %99 = vmatprep.subr.mxu0 0.0
    %100 = vmatpush1.msra.mxu0 %v74
    %101 = vmatprep.subr.mxu0 0.0
    %102 = vmatpush1.msra.mxu0 %v75
    %103 = vmatprep.subr.mxu0 0.0
    %104 = vmatpush1.msra.mxu0 %v76
    %105 = vmatprep.subr.mxu0 0.0
    %106 = vmatpush1.msra.mxu0 %v77
    %107 = vmatprep.subr.mxu0 0.0
    %108 = vmatpush1.msra.mxu0 %v78
    %109 = vmatprep.subr.mxu0 0.0
    %110 = vmatpush1.msra.mxu0 %v79
    %111 = vmatprep.subr.mxu0 0.0
    %112 = vmatpush1.msra.mxu0 %v80
    %113 = vmatprep.subr.mxu0 0.0
    %114 = vmatpush1.msra.mxu0 %v81
    %115 = vmatprep.subr.mxu0 0.0
    %116 = vmatpush1.msra.mxu0 %v82
    %117 = vmatprep.subr.mxu0 0.0
    %118 = vmatpush1.msra.mxu0 %v83
    %119 = vmatprep.subr.mxu0 0.0
    %120 = vmatpush1.msra.mxu0 %v84
    %121 = vmatprep.subr.mxu0 0.0
    %122 = vmatpush1.msra.mxu0 %v85
    %123 = vmatprep.subr.mxu0 0.0
    %124 = vmatpush1.msra.mxu0 %v86
    %125 = vmatprep.subr.mxu0 0.0
    %126 = vmatpush1.msra.mxu0 %v87
    %127 = vmatprep.subr.mxu0 0.0
    %128 = vmatpush1.msra.mxu0 0.0
    %129 = vmatprep.subr.mxu0 0.0
    %130 = vmatpush1.msra.mxu0 0.0
    %131 = vmatprep.subr.mxu0 0.0
    %132 = vmatpush1.msra.mxu0 0.0
    %133 = vmatprep.subr.mxu0 0.0
    %134 = vmatpush1.msra.mxu0 0.0
    %135 = vmatprep.subr.mxu0 0.0
    %136 = vmatpush1.msra.mxu0 0.0
    %137 = vmatprep.subr.mxu0 0.0
    %138 = vmatpush1.msra.mxu0 0.0
    %139 = vmatprep.subr.mxu0 0.0
    %140 = vmatpush1.msra.mxu0 0.0
    %141 = vmatprep.subr.mxu0 0.0
    %142 = vmatpush1.msra.mxu0 0.0
    %143 = vmatprep.subr.mxu0 0.0
    %144 = vmatpush1.msra.mxu0 0.0
    %145 = vmatprep.subr.mxu0 0.0
    %146 = vmatpush1.msra.mxu0 0.0
    %147 = vmatprep.subr.mxu0 0.0
    %148 = vmatpush1.msra.mxu0 0.0
    %149 = vmatprep.subr.mxu0 0.0
    %150 = vmatpush1.msra.mxu0 0.0
    %151 = vmatprep.subr.mxu0 0.0
    %152 = vmatpush1.msra.mxu0 0.0
    %153 = vmatprep.subr.mxu0 0.0
    %154 = vmatpush1.msra.mxu0 0.0
    %155 = vmatprep.subr.mxu0 0.0
    %156 = vmatpush1.msra.mxu0 0.0
    %157 = vmatprep.subr.mxu0 0.0
    %158 = vmatpush1.msra.mxu0 0.0
    %159 = vmatprep.mubr.f32.mxu0 0.0
    %160 = vmatmul.mubr.f32.gmra.mrb[0].mxu0 %v70
    %v161 = vpop.f32.mrb[0].mxu0
    %v162 = vadd.f32 %v93, %v161
    %v163 = vpop.f32.mrb[0].mxu0
    %164 = vdwg.mxu0
    %v165 = vadd.f32 %v162, %v71
    %v166 = vmax.f32 %v165, 0.0
    %v167 = vld [vmem:[#allocation4] sm:$0xff]
    %v168 = vld [vmem:[#allocation4 + $0x8] sm:$0xff]
    %v169 = vld [vmem:[#allocation4 + $0x10] sm:$0xff]
    %v170 = vld [vmem:[#allocation4 + $0x18] sm:$0xff]
    %v171 = vld [vmem:[#allocation4 + $0x20] sm:$0xff]
    %v172 = vld [vmem:[#allocation4 + $0x28] sm:$0xff]
    %v173 = vld [vmem:[#allocation4 + $0x30] sm:$0xff]
    %v174 = vld [vmem:[#allocation4 + $0x38] sm:$0xff]
    %v175 = vld [vmem:[#allocation4 + $0x40] sm:$0xff]
    %v176 = vld [vmem:[#allocation4 + $0x48] sm:$0xff]
    %v177 = vld [vmem:[#allocation4 + $0x50] sm:$0xff]
    %v178 = vld [vmem:[#allocation4 + $0x58] sm:$0xff]
    %v179 = vld [vmem:[#allocation4 + $0x60] sm:$0xff]
    %v180 = vld [vmem:[#allocation4 + $0x68] sm:$0xff]
    %v181 = vld [vmem:[#allocation4 + $0x70] sm:$0xff]
    %v182 = vld [vmem:[#allocation4 + $0x78] sm:$0xff]
    %v183 = vld [vmem:[%s5] sm:$0x1]
    %v185 = vlaneseq
    %v186 = vshrl.u32 %v185, 7
    %v187 = vsub.s32 0, %v186
    %v188 = vrot.slane %v183, %v187
    %190 = vmatprep.subr.mxu0 0.0
    %191 = vmatpush1.msra.mxu0 %v167
    %192 = vmatprep.subr.mxu0 0.0
    %193 = vmatpush1.msra.mxu0 %v168
    %194 = vmatprep.subr.mxu0 0.0
    %195 = vmatpush1.msra.mxu0 %v169
    %196 = vmatprep.subr.mxu0 0.0
    %197 = vmatpush1.msra.mxu0 %v170
    %198 = vmatprep.subr.mxu0 0.0
    %199 = vmatpush1.msra.mxu0 %v171
    %200 = vmatprep.subr.mxu0 0.0
    %201 = vmatpush1.msra.mxu0 %v172
    %202 = vmatprep.subr.mxu0 0.0
    %203 = vmatpush1.msra.mxu0 %v173
    %204 = vmatprep.subr.mxu0 0.0
    %205 = vmatpush1.msra.mxu0 %v174
    %206 = vmatprep.subr.mxu0 0.0
    %207 = vmatpush1.msra.mxu0 %v175
    %208 = vmatprep.subr.mxu0 0.0
    %209 = vmatpush1.msra.mxu0 %v176
    %210 = vmatprep.subr.mxu0 0.0
    %211 = vmatpush1.msra.mxu0 %v177
    %212 = vmatprep.subr.mxu0 0.0
    %213 = vmatpush1.msra.mxu0 %v178
    %214 = vmatprep.subr.mxu0 0.0
    %215 = vmatpush1.msra.mxu0 %v179
    %216 = vmatprep.subr.mxu0 0.0
    %217 = vmatpush1.msra.mxu0 %v180
    %218 = vmatprep.subr.mxu0 0.0
    %219 = vmatpush1.msra.mxu0 %v181
    %220 = vmatprep.subr.mxu0 0.0
    %221 = vmatpush1.msra.mxu0 %v182
    %222 = vmatprep.subr.mxu0 0.0
    %223 = vmatpush1.msra.mxu0 0.0
    %224 = vmatprep.subr.mxu0 0.0
    %225 = vmatpush1.msra.mxu0 0.0
    %226 = vmatprep.subr.mxu0 0.0
    %227 = vmatpush1.msra.mxu0 0.0
    %228 = vmatprep.subr.mxu0 0.0
    %229 = vmatpush1.msra.mxu0 0.0
    %230 = vmatprep.subr.mxu0 0.0
    %231 = vmatpush1.msra.mxu0 0.0
    %232 = vmatprep.subr.mxu0 0.0
    %233 = vmatpush1.msra.mxu0 0.0
    %234 = vmatprep.subr.mxu0 0.0
    %235 = vmatpush1.msra.mxu0 0.0
    %236 = vmatprep.subr.mxu0 0.0
    %237 = vmatpush1.msra.mxu0 0.0
    %238 = vmatprep.subr.mxu0 0.0
    %239 = vmatpush1.msra.mxu0 0.0
    %240 = vmatprep.subr.mxu0 0.0
    %241 = vmatpush1.msra.mxu0 0.0
    %242 = vmatprep.subr.mxu0 0.0
    %243 = vmatpush1.msra.mxu0 0.0
    %244 = vmatprep.subr.mxu0 0.0
    %245 = vmatpush1.msra.mxu0 0.0
    %246 = vmatprep.subr.mxu0 0.0
    %247 = vmatpush1.msra.mxu0 0.0
    %248 = vmatprep.subr.mxu0 0.0
    %249 = vmatpush1.msra.mxu0 0.0
    %250 = vmatprep.subr.mxu0 0.0
    %251 = vmatpush1.msra.mxu0 0.0
    %252 = vmatprep.subr.mxu0 0.0
    %253 = vmatpush1.msra.mxu0 0.0
    %254 = vmatprep.mubr.f32.mxu0 0.0
    %255 = vmatmul.mubr.f32.gmra.mrb[0].mxu0 %v166
    %v256 = vpop.f32.mrb[0].mxu0
    %v257 = vadd.f32 %v188, %v256
    %v258 = vpop.f32.mrb[0].mxu0
    %259 = vdwg.mxu0
    %v260 = vmax.f32 %v257, 0.0
    %v261 = vld [vmem:[#allocation6] sm:$0xff]
    %v262 = vld [vmem:[#allocation6 + $0x8] sm:$0xff]
    %v263 = vld [vmem:[#allocation6 + $0x10] sm:$0xff]
    %v264 = vld [vmem:[#allocation6 + $0x18] sm:$0xff]
    %v265 = vld [vmem:[#allocation6 + $0x20] sm:$0xff]
    %v266 = vld [vmem:[#allocation6 + $0x28] sm:$0xff]
    %v267 = vld [vmem:[#allocation6 + $0x30] sm:$0xff]
    %v268 = vld [vmem:[#allocation6 + $0x38] sm:$0xff]
    %v269 = vld [vmem:[#allocation6 + $0x40] sm:$0xff]
    %v270 = vld [vmem:[#allocation6 + $0x48] sm:$0xff]
    %v271 = vld [vmem:[#allocation6 + $0x50] sm:$0xff]
    %v272 = vld [vmem:[#allocation6 + $0x58] sm:$0xff]
    %v273 = vld [vmem:[#allocation6 + $0x60] sm:$0xff]
    %v274 = vld [vmem:[#allocation6 + $0x68] sm:$0xff]
    %v275 = vld [vmem:[#allocation6 + $0x70] sm:$0xff]
    %v276 = vld [vmem:[#allocation6 + $0x78] sm:$0xff]
    %v277 = vld [vmem:[%s7] sm:$0x1]
    %v279 = vlaneseq
    %v280 = vshrl.u32 %v279, 7
    %v281 = vsub.s32 0, %v280
    %v282 = vrot.slane %v277, %v281
    %284 = vmatprep.subr.mxu0 0.0
    %285 = vmatpush1.msra.mxu0 %v261
    %286 = vmatprep.subr.mxu0 0.0
    %287 = vmatpush1.msra.mxu0 %v262
    %288 = vmatprep.subr.mxu0 0.0
    %289 = vmatpush1.msra.mxu0 %v263
    %290 = vmatprep.subr.mxu0 0.0
    %291 = vmatpush1.msra.mxu0 %v264
    %292 = vmatprep.subr.mxu0 0.0
    %293 = vmatpush1.msra.mxu0 %v265
    %294 = vmatprep.subr.mxu0 0.0
    %295 = vmatpush1.msra.mxu0 %v266
    %296 = vmatprep.subr.mxu0 0.0
    %297 = vmatpush1.msra.mxu0 %v267
    %298 = vmatprep.subr.mxu0 0.0
    %299 = vmatpush1.msra.mxu0 %v268
    %300 = vmatprep.subr.mxu0 0.0
    %301 = vmatpush1.msra.mxu0 %v269
    %302 = vmatprep.subr.mxu0 0.0
    %303 = vmatpush1.msra.mxu0 %v270
    %304 = vmatprep.subr.mxu0 0.0
    %305 = vmatpush1.msra.mxu0 %v271
    %306 = vmatprep.subr.mxu0 0.0
    %307 = vmatpush1.msra.mxu0 %v272
    %308 = vmatprep.subr.mxu0 0.0
    %309 = vmatpush1.msra.mxu0 %v273
    %310 = vmatprep.subr.mxu0 0.0
    %311 = vmatpush1.msra.mxu0 %v274
    %312 = vmatprep.subr.mxu0 0.0
    %313 = vmatpush1.msra.mxu0 %v275
    %314 = vmatprep.subr.mxu0 0.0
    %315 = vmatpush1.msra.mxu0 %v276
    %316 = vmatprep.subr.mxu0 0.0
    %317 = vmatpush1.msra.mxu0 0.0
    %318 = vmatprep.subr.mxu0 0.0
    %319 = vmatpush1.msra.mxu0 0.0
    %320 = vmatprep.subr.mxu0 0.0
    %321 = vmatpush1.msra.mxu0 0.0
    %322 = vmatprep.subr.mxu0 0.0
    %323 = vmatpush1.msra.mxu0 0.0
    %324 = vmatprep.subr.mxu0 0.0
    %325 = vmatpush1.msra.mxu0 0.0
    %326 = vmatprep.subr.mxu0 0.0
    %327 = vmatpush1.msra.mxu0 0.0
    %328 = vmatprep.subr.mxu0 0.0
    %329 = vmatpush1.msra.mxu0 0.0
    %330 = vmatprep.subr.mxu0 0.0
    %331 = vmatpush1.msra.mxu0 0.0
    %332 = vmatprep.subr.mxu0 0.0
    %333 = vmatpush1.msra.mxu0 0.0
    %334 = vmatprep.subr.mxu0 0.0
    %335 = vmatpush1.msra.mxu0 0.0
    %336 = vmatprep.subr.mxu0 0.0
    %337 = vmatpush1.msra.mxu0 0.0
    %338 = vmatprep.subr.mxu0 0.0
    %339 = vmatpush1.msra.mxu0 0.0
    %340 = vmatprep.subr.mxu0 0.0
    %341 = vmatpush1.msra.mxu0 0.0
    %342 = vmatprep.subr.mxu0 0.0
    %343 = vmatpush1.msra.mxu0 0.0
    %344 = vmatprep.subr.mxu0 0.0
    %345 = vmatpush1.msra.mxu0 0.0
    %346 = vmatprep.subr.mxu0 0.0
    %347 = vmatpush1.msra.mxu0 0.0
    %348 = vmatprep.mubr.f32.mxu0 0.0
    %349 = vmatmul.mubr.f32.gmra.mrb[0].mxu0 %v260
    %v350 = vpop.f32.mrb[0].mxu0
    %v351 = vadd.f32 %v282, %v350
    %v352 = vpop.f32.mrb[0].mxu0
    %353 = vdwg.mxu0
    %354 = vst [vmem:[%s8] sm:$0xff] %v351
    // Predicated region
    $region46: #{encoder_forward.1} parent=1 // pred_check
      _
    $region47: #{encoder_forward.1} parent=1 // pred_check_branch
      %356 = sbr.rel (0) target = $region49
    $region48: #{encoder_forward.1} parent=1 // pred_region
      _
    $region49: #{encoder_forward.1} parent=1 // pred_fallthru
      _
    // Predicated region
    $region50: #{encoder_forward.1} parent=1 // pred_check
      _
    $region51: #{encoder_forward.1} parent=1 // pred_check_branch
      %358 = sbr.rel (0) target = $region53
    $region52: #{encoder_forward.1} parent=1 // pred_region
      _
    $region53: #{encoder_forward.1} parent=1 // pred_fallthru
      _
    %359 = vsyncpa [#allocation3], 1
    %360 = vsyncpa [#allocation5], 1

</llo_original>
